<compile_context>
chip_gen: v6e
topology: v6e:2x2x1
jax: 0.10.0
libtpu: 0.0.40
codegen_flags: <defaults>
</compile_context>

<pallas_src>
import functools

import jax
import jax.numpy as jnp
from jax.experimental import pallas as pl
from jax.experimental.pallas import tpu as pltpu


def _se_weight_kernel(x_ref, w1t_ref, b1_ref, w2t_ref, b2_ref, out_ref, acc_ref,
                      *, L, TL, mask_l):
    """Grid = (N blocks, L blocks); L is the reduction ('arbitrary') axis."""
    l = pl.program_id(1)
    last = pl.num_programs(1) - 1

    # Zero the pooled-sum accumulator at the start of each N-row's L sweep.
    @pl.when(l == 0)
    def _init():
        acc_ref[...] = jnp.zeros_like(acc_ref)

    # Stream one (TN, C, TL) tile of x; upcast to f32 and accumulate the sum.
    if mask_l:
        # Only the last L tile is partial: keep the iota/compare/select off the
        # non-tail tiles so they stay pure load + reduce (hidden under DMA).
        @pl.when(l != last)
        def _acc_full():
            acc_ref[...] += jnp.sum(x_ref[...].astype(jnp.float32), axis=-1)

        @pl.when(l == last)
        def _acc_tail():
            x = x_ref[...].astype(jnp.float32)
            lane = jax.lax.broadcasted_iota(jnp.int32, x.shape, dimension=2)
            valid = (l * TL + lane) < L
            acc_ref[...] += jnp.sum(jnp.where(valid, x, 0.0), axis=-1)
    else:
        acc_ref[...] += jnp.sum(x_ref[...].astype(jnp.float32), axis=-1)

    # Finalize on the last L tile: mean, fc1 + ReLU, fc2 + sigmoid.
    @pl.when(l == last)
    def _finalize():
        pooled = acc_ref[...] * jnp.float32(1.0 / L)      # divide by true L once
        h = jnp.dot(pooled, w1t_ref[...],
                    preferred_element_type=jnp.float32) + b1_ref[...]
        h = jnp.maximum(h, 0.0)
        o = jnp.dot(h, w2t_ref[...],
                    preferred_element_type=jnp.float32) + b2_ref[...]
        out_ref[...] = jax.nn.sigmoid(o)[:, :, None].astype(out_ref.dtype)


def _vmem_budgets():
    """Generation-aware (x-tile byte budget, scoped vmem_limit_bytes)."""
    cap = None
    try:
        info = pltpu.get_tpu_info()
        cap = getattr(info, "vmem_capacity_bytes", None)
    except Exception:
        cap = None
    if cap is None:
        cap = 64 * 1024 * 1024                      # assume the smallest (v7x-like)
    if cap >= 128 * 1024 * 1024:                    # v5e / v6e: 128 MiB physical
        return 8 * 1024 * 1024, 64 * 1024 * 1024
    # v7x: 64 MiB physical per TC -> keep double-buffered stream + params well under.
    return 6 * 1024 * 1024, 32 * 1024 * 1024


def se_weight_module(x, w1, b1, w2, b2, *, l_block=None, out_dtype=jnp.float32):
    """Pallas implementation of SEWeightModule.forward.

    Args:
      x:  (N, C, L) float32 or bfloat16 (streamed in native dtype)
      w1: (H, C)  fc1 weight (PyTorch convention: out_features x in_features)
      b1: (H,)
      w2: (C, H)  fc2 weight
      b2: (C,)
      l_block: optional override of the L tile width (multiple of 128 unless == L)

    Returns:
      weight: (N, C, 1) in out_dtype
    """
    N, C, L = x.shape
    H = w1.shape[0]

    # Glue (not the hot path): transpose weights for row-major matmuls,
    # biases as 2D rows for clean broadcasting.
    w1t = jnp.asarray(w1, jnp.float32).T            # (C, H)
    w2t = jnp.asarray(w2, jnp.float32).T            # (H, C)
    b1r = jnp.asarray(b1, jnp.float32).reshape(1, H)
    b2r = jnp.asarray(b2, jnp.float32).reshape(1, C)

    x_budget, vmem_limit = _vmem_budgets()
    itemsize = jnp.dtype(x.dtype).itemsize

    # --- Tile selection -------------------------------------------------------
    # N tile: ceil(N/2) (capped at 8) so there are >= 2 blocks on the "parallel"
    # axis whenever N >= 2 -> megacore shards the stream across both TCs.
    TN = max(1, min(8, -(-N // 2)))
    # Shrink TN for very wide C so even a minimal 128-lane tile fits the budget.
    while TN > 1 and TN * C * 128 * itemsize > x_budget:
        TN = (TN + 1) // 2
    # TODO(synk): for extremely wide C where even TN=1 blows the budget, a C-block
    # grid axis (per-C-block accumulator) would be needed; not required here.

    if l_block is None:
        max_tl = max(128, x_budget // (TN * C * itemsize))
        if L <= max_tl:
            TL = L                                   # whole L fits in one tile
        else:
            TL = max(128, (max_tl // 128) * 128)     # lane-dense, budget-sized
    else:
        TL = l_block
    mask_l = (L % TL) != 0

    grid = (pl.cdiv(N, TN), pl.cdiv(L, TL))

    kernel = functools.partial(_se_weight_kernel, L=L, TL=TL, mask_l=mask_l)

    out = pl.pallas_call(
        kernel,
        out_shape=jax.ShapeDtypeStruct((N, C, 1), out_dtype),
        grid=grid,
        in_specs=[
            # x streamed tile-by-tile (native dtype, lane axis = L).
            pl.BlockSpec((TN, C, TL), lambda n, l: (n, 0, l)),
            # Parameters: constant block index -> fetched once, kept resident.
            pl.BlockSpec((C, H), lambda n, l: (0, 0)),
            pl.BlockSpec((1, H), lambda n, l: (0, 0)),
            pl.BlockSpec((H, C), lambda n, l: (0, 0)),
            pl.BlockSpec((1, C), lambda n, l: (0, 0)),
        ],
        # Output block revisited across the L (reduction) axis; written on last step.
        out_specs=pl.BlockSpec((TN, C, 1), lambda n, l: (n, 0, 0)),
        scratch_shapes=[pltpu.VMEM((TN, C), jnp.float32)],
        compiler_params=pltpu.CompilerParams(
            dimension_semantics=("parallel", "arbitrary"),
            vmem_limit_bytes=vmem_limit,
        ),
    )(x, w1t, b1r, w2t, b2r)

    return out                                       # already (N, C, 1)


def _reference(x, w1, b1, w2, b2):
    pooled = jnp.mean(x.astype(jnp.float32), axis=-1)
    h = jnp.maximum(pooled @ w1.T + b1, 0.0)
    o = h @ w2.T + b2
    return jax.nn.sigmoid(o)[..., None]


def _make_params(key, C, H):
    kw1, kb1, kw2, kb2 = jax.random.split(key, 4)
    bound1 = 1.0 / (C ** 0.5)
    w1 = jax.random.uniform(kw1, (H, C), jnp.float32, -bound1, bound1)
    b1 = jax.random.uniform(kb1, (H,), jnp.float32, -bound1, bound1)
    bound2 = 1.0 / (H ** 0.5)
    w2 = jax.random.uniform(kw2, (C, H), jnp.float32, -bound2, bound2)
    b2 = jax.random.uniform(kb2, (C,), jnp.float32, -bound2, bound2)
    return w1, b1, w2, b2


if __name__ == "__main__":
    key = jax.random.PRNGKey(0)
    k1, k2, k3, k4 = jax.random.split(key, 4)

    # --- Case 1: small shapes matching the module (N, C, L), reduction=4 -----
    N, C, L = 2, 16, 16
    H = C // 4
    x = jax.random.normal(k1, (N, C, L), dtype=jnp.float32)
    w1, b1, w2, b2 = _make_params(k2, C, H)

    out = se_weight_module(x, w1, b1, w2, b2)
    out = jax.block_until_ready(out)
    ref = _reference(x, w1, b1, w2, b2)
    assert out.shape == (N, C, 1), out.shape
    assert jnp.allclose(out, ref, atol=1e-5, rtol=1e-4), "case1 mismatch vs reference"

    # --- Case 2: exercise the L grid + tail masking + 2 parallel N blocks ----
    N2, C2, L2 = 2, 128, 272          # 272 = 2*128 + 16 -> 3 L-tiles, masked tail
    H2 = C2 // 4
    x2 = jax.random.normal(k3, (N2, C2, L2), dtype=jnp.float32)
    w1b, b1b, w2b, b2b = _make_params(k4, C2, H2)

    out2 = se_weight_module(x2, w1b, b1b, w2b, b2b, l_block=128)
    out2 = jax.block_until_ready(out2)
    ref2 = _reference(x2, w1b, b1b, w2b, b2b)
    assert out2.shape == (N2, C2, 1), out2.shape
    assert jnp.allclose(out2, ref2, atol=1e-5, rtol=1e-4), "case2 mismatch vs reference"

    print("KERNEL_OK")
</pallas_src>

<mosaic_0001>
module attributes {stable_mosaic.version = 11 : i64} {
  func.func @_se_weight_kernel(%arg0: i32, %arg1: i32, %arg2: memref<1x16x16xf32, #tpu.memory_space<vmem>>, %arg3: memref<16x4xf32, #tpu.memory_space<vmem>>, %arg4: memref<1x4xf32, #tpu.memory_space<vmem>>, %arg5: memref<4x16xf32, #tpu.memory_space<vmem>>, %arg6: memref<1x16xf32, #tpu.memory_space<vmem>>, %arg7: memref<1x16x1xf32, #tpu.memory_space<vmem>>, %arg8: memref<1x16xf32, #tpu.memory_space<vmem>>) attributes {dimension_semantics = [#tpu.dimension_semantics<parallel>, #tpu.dimension_semantics<arbitrary>], iteration_bounds = array<i64: 2, 1>, scalar_prefetch = 0 : i64, scratch_operands = 1 : i64, tpu.core_type = #tpu.core_type<tc>, window_params = [{transform_indices = @transform_0, window_bounds = array<i64: 1, 16, 16>}, {pipeline_mode = #tpu.pipeline_mode<synchronous>, transform_indices = @transform_1, window_bounds = array<i64: 16, 4>}, {pipeline_mode = #tpu.pipeline_mode<synchronous>, transform_indices = @transform_2, window_bounds = array<i64: 1, 4>}, {pipeline_mode = #tpu.pipeline_mode<synchronous>, transform_indices = @transform_3, window_bounds = array<i64: 4, 16>}, {pipeline_mode = #tpu.pipeline_mode<synchronous>, transform_indices = @transform_4, window_bounds = array<i64: 1, 16>}, {transform_indices = @transform_5, window_bounds = array<i64: 1, 16, 1>}]} {
    %c0_i32 = arith.constant 0 : i32
    %0 = arith.cmpi eq, %arg1, %c0_i32 : i32
    %1 = arith.extui %0 : i1 to i32
    %c0_i32_0 = arith.constant 0 : i32
    %2 = arith.cmpi ne, %1, %c0_i32_0 : i32
    scf.if %2 {
      %cst_9 = arith.constant 0.000000e+00 : f32
      %11 = vector.broadcast %cst_9 : f32 to vector<1x16xf32>
      %c0_10 = arith.constant 0 : index
      %c0_11 = arith.constant 0 : index
      %12 = vector.load %arg8[%c0_10, %c0_11] : memref<1x16xf32, #tpu.memory_space<vmem>>, vector<1x16xf32>
      tpu.vector_store %arg8[%c0_10, %c0_11], %11 {strides = array<i32>} : memref<1x16xf32, #tpu.memory_space<vmem>>, vector<1x16xf32>,
    } else {
    }
    %c0 = arith.constant 0 : index
    %c0_1 = arith.constant 0 : index
    %3 = vector.load %arg8[%c0, %c0_1] : memref<1x16xf32, #tpu.memory_space<vmem>>, vector<1x16xf32>
    %c0_2 = arith.constant 0 : index
    %c0_3 = arith.constant 0 : index
    %c0_4 = arith.constant 0 : index
    %4 = vector.load %arg2[%c0_2, %c0_3, %c0_4] : memref<1x16x16xf32, #tpu.memory_space<vmem>>, vector<1x16x16xf32>
    %cst = arith.constant dense<0.000000e+00> : vector<1x16xf32>
    %5 = vector.multi_reduction <add>, %4, %cst [2] : vector<1x16x16xf32> to vector<1x16xf32>
    %6 = arith.addf %3, %5 : vector<1x16xf32>
    %c0_5 = arith.constant 0 : index
    %c0_6 = arith.constant 0 : index
    %7 = vector.load %arg8[%c0_5, %c0_6] : memref<1x16xf32, #tpu.memory_space<vmem>>, vector<1x16xf32>
    tpu.vector_store %arg8[%c0_5, %c0_6], %6 {strides = array<i32>} : memref<1x16xf32, #tpu.memory_space<vmem>>, vector<1x16xf32>,
    %c0_i32_7 = arith.constant 0 : i32
    %8 = arith.cmpi eq, %arg1, %c0_i32_7 : i32
    %9 = arith.extui %8 : i1 to i32
    %c0_i32_8 = arith.constant 0 : i32
    %10 = arith.cmpi ne, %9, %c0_i32_8 : i32
    scf.if %10 {
      %c0_9 = arith.constant 0 : index
      %c0_10 = arith.constant 0 : index
      %11 = vector.load %arg8[%c0_9, %c0_10] : memref<1x16xf32, #tpu.memory_space<vmem>>, vector<1x16xf32>
      %cst_11 = arith.constant 6.250000e-02 : f32
      %12 = vector.broadcast %cst_11 : f32 to vector<1x16xf32>
      %13 = arith.mulf %11, %12 : vector<1x16xf32>
      %c0_12 = arith.constant 0 : index
      %c0_13 = arith.constant 0 : index
      %14 = vector.load %arg3[%c0_12, %c0_13] : memref<16x4xf32, #tpu.memory_space<vmem>>, vector<16x4xf32>
      %cst_14 = arith.constant dense<0.000000e+00> : vector<1x4xf32>
      %15 = tpu.matmul %13, %14, %cst_14 {dimension_numbers = #tpu.dot_dimension_numbers<[1], [0], [0], [1], [0, 0, 1, 1], [], []>} : vector<1x16xf32>, vector<16x4xf32>, vector<1x4xf32> -> vector<1x4xf32>
      %c0_15 = arith.constant 0 : index
      %c0_16 = arith.constant 0 : index
      %16 = vector.load %arg4[%c0_15, %c0_16] : memref<1x4xf32, #tpu.memory_space<vmem>>, vector<1x4xf32>
      %17 = arith.addf %15, %16 : vector<1x4xf32>
      %cst_17 = arith.constant 0.000000e+00 : f32
      %18 = vector.broadcast %cst_17 : f32 to vector<1x4xf32>
      %19 = arith.maximumf %17, %18 : vector<1x4xf32>
      %c0_18 = arith.constant 0 : index
      %c0_19 = arith.constant 0 : index
      %20 = vector.load %arg5[%c0_18, %c0_19] : memref<4x16xf32, #tpu.memory_space<vmem>>, vector<4x16xf32>
      %cst_20 = arith.constant dense<0.000000e+00> : vector<1x16xf32>
      %21 = tpu.matmul %19, %20, %cst_20 {dimension_numbers = #tpu.dot_dimension_numbers<[1], [0], [0], [1], [0, 0, 1, 1], [], []>} : vector<1x4xf32>, vector<4x16xf32>, vector<1x16xf32> -> vector<1x16xf32>
      %c0_21 = arith.constant 0 : index
      %c0_22 = arith.constant 0 : index
      %22 = vector.load %arg6[%c0_21, %c0_22] : memref<1x16xf32, #tpu.memory_space<vmem>>, vector<1x16xf32>
      %23 = arith.addf %21, %22 : vector<1x16xf32>
      %24 = arith.negf %23 : vector<1x16xf32>
      %25 = math.exp %24 : vector<1x16xf32>
      %cst_23 = arith.constant 1.000000e+00 : f32
      %26 = vector.broadcast %cst_23 : f32 to vector<1x16xf32>
      %27 = arith.addf %26, %25 : vector<1x16xf32>
      %28 = arith.divf %26, %27 : vector<1x16xf32>
      %29 = vector.shape_cast %28 : vector<1x16xf32> to vector<1x16x1xf32>
      %c0_24 = arith.constant 0 : index
      %c0_25 = arith.constant 0 : index
      %c0_26 = arith.constant 0 : index
      %30 = vector.load %arg7[%c0_24, %c0_25, %c0_26] : memref<1x16x1xf32, #tpu.memory_space<vmem>>, vector<1x16x1xf32>
      tpu.vector_store %arg7[%c0_24, %c0_25, %c0_26], %29 {strides = array<i32>} : memref<1x16x1xf32, #tpu.memory_space<vmem>>, vector<1x16x1xf32>,
    } else {
    }
    return
  }
  func.func @transform_0(%arg0: i32, %arg1: i32) -> (i32, i32, i32) {
    %c0_i32 = arith.constant 0 : i32
    %c0_i32_0 = arith.constant 0 : i32
    return %arg0, %c0_i32, %arg1 : i32, i32, i32
  }
  func.func @transform_1(%arg0: i32, %arg1: i32) -> (i32, i32) {
    %c0_i32 = arith.constant 0 : i32
    %c0_i32_0 = arith.constant 0 : i32
    %c0_i32_1 = arith.constant 0 : i32
    return %c0_i32, %c0_i32_0 : i32, i32
  }
  func.func @transform_2(%arg0: i32, %arg1: i32) -> (i32, i32) {
    %c0_i32 = arith.constant 0 : i32
    %c0_i32_0 = arith.constant 0 : i32
    %c0_i32_1 = arith.constant 0 : i32
    return %c0_i32, %c0_i32_0 : i32, i32
  }
  func.func @transform_3(%arg0: i32, %arg1: i32) -> (i32, i32) {
    %c0_i32 = arith.constant 0 : i32
    %c0_i32_0 = arith.constant 0 : i32
    %c0_i32_1 = arith.constant 0 : i32
    return %c0_i32, %c0_i32_0 : i32, i32
  }
  func.func @transform_4(%arg0: i32, %arg1: i32) -> (i32, i32) {
    %c0_i32 = arith.constant 0 : i32
    %c0_i32_0 = arith.constant 0 : i32
    %c0_i32_1 = arith.constant 0 : i32
    return %c0_i32, %c0_i32_0 : i32, i32
  }
  func.func @transform_5(%arg0: i32, %arg1: i32) -> (i32, i32, i32) {
    %c0_i32 = arith.constant 0 : i32
    %c0_i32_0 = arith.constant 0 : i32
    %c0_i32_1 = arith.constant 0 : i32
    return %arg0, %c0_i32, %c0_i32_0 : i32, i32, i32
  }
}

</mosaic_0001>

<llo_original>
// kernel: tpu_custom_call.1
$region0: #{tpu_custom_call.1}
  #allocation0 [shape = 'u32[]', space=smem, size = 0x4, offset = 0x4, fixed_abs, tag = 'smem constant byte address 0x4 - core index']
  #allocation1 [shape = 'u32[144,128]{1,0:T(1,128)}', space=vmem, size = 0x12000, scoped, tag = 'internal scratch']
  #allocation2 [shape = 'f32[1,16]{1,0:T(1,128)}', space=vmem, size = 0x200, scoped, tag = 'scratch operand']
  %s0 = inlined_call_operand.hbm [shape: f32[2,16,16], index: 0, kind: input, shape index: {}]
  %s1 = inlined_call_operand.vmem [shape: f32[16,4], index: 1, kind: input, shape index: {}]
  %s2 = inlined_call_operand.vmem [shape: f32[1,4], index: 2, kind: input, shape index: {}]
  %s3 = inlined_call_operand.vmem [shape: f32[4,16], index: 3, kind: input, shape index: {}]
  %s4 = inlined_call_operand.vmem [shape: f32[1,16], index: 4, kind: input, shape index: {}]
  %s5 = inlined_call_operand.vmem [shape: f32[2,16,1], index: 5, kind: output, shape index: {}]
  %s6 = sld [smem:[#allocation0]]
  $region65: #{tpu_custom_call.1} parent=0
    _
  %s8 = ssub.s32 1, %s6
  %s9 = scalar_select 0, %s8, %s6
  $region1: #{tpu_custom_call.1} parent=0
    #allocation3 [shape = 'u8[16384]{0}', space=vmem, size = 0x4000, scoped, tag = 'input window, operand 0']
    #allocation4 [shape = 's32[2]{0}', space=sflag, size = 0x8, scoped, tag = 'scoped memory for tpu_custom_call.1']
    %10 = vsyncpa [#allocation4], 0
    %s11 = scalar_lea.sflag [#allocation4], 1
    %12 = vsyncpa %s11, 0
    loop: start=0, step=1, limit=4
    $region2: #{tpu_custom_call.1} parent=1 // loop_pre_header
      _
    $region3: #{tpu_custom_call.1} parent=1 // loop_header
      %s14 = sphi 0, %s18
      %p15 = scmp.ge.s32.totalorder %s14, 4
      %s21 = sphi 0, %s33
      %s22 = sphi 0, %s29
      %s23 = sphi 0, %s21
      %s24 = sphi 0, %s22
      %s25 = sphi 0, %s23
      %s26 = sphi 0, %s24
      %s38 = sphi 0, %s40
      %s41 = sphi 0, %s38
      %s42 = sphi 0, %s41
      %s58 = sphi 0, %s42
      %s62 = sphi 0, %s62
      %s64 = sphi 0, %s62
      %s65 = sphi 0, %s64
      %s79 = sphi 0, %s65
      %s83 = sphi 0, %s83
      %s85 = sphi 0, %s83
      %s86 = sphi 0, %s85
      %s100 = sphi 0, %s86
      %s104 = sphi 0, %s104
      %s106 = sphi 0, %s104
      %s107 = sphi 0, %s106
      %s121 = sphi 0, %s107
      %s125 = sphi 0, %s125
      %s127 = sphi 0, %s125
      %s128 = sphi 0, %s127
      %s142 = sphi 0, %s128
      %s148 = sphi 0, %s150
      %s151 = sphi 0, %s148
      %s152 = sphi 0, %s151
      %s168 = sphi 0, %s152
    $region4: #{tpu_custom_call.1} parent=1 // loop_header_branch
      %17 = sbr.rel (%p15) target = $region8
    $region5: #{tpu_custom_call.1} parent=1 // loop_body
      %s19 = ssub.s32 %s14, 1
      %s20 = ssub.s32 %s14, 2
      %s27 = sadd.s32 1, %s22
      %p28 = scmp.ge.s32.totalorder %s27, 1
      %s29 = scalar_select %p28, 0, %s27
      %s30 = sadd.s32 1, %s21
      %s31 = scalar_select %p28, %s30, %s21
      %p32 = scmp.ge.s32.totalorder %s31, 2
      %s33 = scalar_select %p32, 0, %s31
      %s34 = ssub.s32 %s21, %s33
      %s35 = ssub.s32 %s22, %s29
      %s36 = sor.u32 %s34, %s35
      %p37 = scmp.eq.s32.totalorder %s36, 0
      %s39 = sadd.s32 %s38, 1
      %s40 = scalar_select %p37, %s38, %s39
      %p43 = pneg %p37
      %p44 = scmp.eq.s32.totalorder %s14, 1
      %p45 = por %p43, %p44
      %p46 = scmp.ne.s32.totalorder %s38, %s41
      %p47 = scmp.eq.s32.totalorder %s14, 0
      %p48 = por %p46, %p47
      %p49 = scmp.ne.s32.totalorder %s38, %s41
      %p50 = scmp.eq.s32.totalorder %s19, 1
      %p51 = por %p49, %p50
      %p52 = scmp.ne.s32.totalorder %s41, %s42
      %p53 = scmp.eq.s32.totalorder %s19, 0
      %p54 = por %p52, %p53
      %p55 = scmp.ne.s32.totalorder %s41, %s42
      %p56 = scmp.eq.s32.totalorder %s20, 1
      %p57 = por %p55, %p56
      %p59 = scmp.ne.s32.totalorder %s42, %s58
      %p60 = scmp.eq.s32.totalorder %s20, 0
      %p61 = por %p59, %p60
      %s63 = sadd.s32 %s62, 1
      %p66 = scmp.eq.s32.totalorder %s14, 1
      %p67 = scmp.ne.s32.totalorder %s62, %s64
      %p68 = scmp.eq.s32.totalorder %s14, 0
      %p69 = por %p67, %p68
      %p70 = scmp.ne.s32.totalorder %s62, %s64
      %p71 = scmp.eq.s32.totalorder %s19, 1
      %p72 = por %p70, %p71
      %p73 = scmp.ne.s32.totalorder %s64, %s65
      %p74 = scmp.eq.s32.totalorder %s19, 0
      %p75 = por %p73, %p74
      %p76 = scmp.ne.s32.totalorder %s64, %s65
      %p77 = scmp.eq.s32.totalorder %s20, 1
      %p78 = por %p76, %p77
      %p80 = scmp.ne.s32.totalorder %s65, %s79
      %p81 = scmp.eq.s32.totalorder %s20, 0
      %p82 = por %p80, %p81
      %s84 = sadd.s32 %s83, 1
      %p87 = scmp.eq.s32.totalorder %s14, 1
      %p88 = scmp.ne.s32.totalorder %s83, %s85
      %p89 = scmp.eq.s32.totalorder %s14, 0
      %p90 = por %p88, %p89
      %p91 = scmp.ne.s32.totalorder %s83, %s85
      %p92 = scmp.eq.s32.totalorder %s19, 1
      %p93 = por %p91, %p92
      %p94 = scmp.ne.s32.totalorder %s85, %s86
      %p95 = scmp.eq.s32.totalorder %s19, 0
      %p96 = por %p94, %p95
      %p97 = scmp.ne.s32.totalorder %s85, %s86
      %p98 = scmp.eq.s32.totalorder %s20, 1
      %p99 = por %p97, %p98
      %p101 = scmp.ne.s32.totalorder %s86, %s100
      %p102 = scmp.eq.s32.totalorder %s20, 0
      %p103 = por %p101, %p102
      %s105 = sadd.s32 %s104, 1
      %p108 = scmp.eq.s32.totalorder %s14, 1
      %p109 = scmp.ne.s32.totalorder %s104, %s106
      %p110 = scmp.eq.s32.totalorder %s14, 0
      %p111 = por %p109, %p110
      %p112 = scmp.ne.s32.totalorder %s104, %s106
      %p113 = scmp.eq.s32.totalorder %s19, 1
      %p114 = por %p112, %p113
      %p115 = scmp.ne.s32.totalorder %s106, %s107
      %p116 = scmp.eq.s32.totalorder %s19, 0
      %p117 = por %p115, %p116
      %p118 = scmp.ne.s32.totalorder %s106, %s107
      %p119 = scmp.eq.s32.totalorder %s20, 1
      %p120 = por %p118, %p119
      %p122 = scmp.ne.s32.totalorder %s107, %s121
      %p123 = scmp.eq.s32.totalorder %s20, 0
      %p124 = por %p122, %p123
      %s126 = sadd.s32 %s125, 1
      %p129 = scmp.eq.s32.totalorder %s14, 1
      %p130 = scmp.ne.s32.totalorder %s125, %s127
      %p131 = scmp.eq.s32.totalorder %s14, 0
      %p132 = por %p130, %p131
      %p133 = scmp.ne.s32.totalorder %s125, %s127
      %p134 = scmp.eq.s32.totalorder %s19, 1
      %p135 = por %p133, %p134
      %p136 = scmp.ne.s32.totalorder %s127, %s128
      %p137 = scmp.eq.s32.totalorder %s19, 0
      %p138 = por %p136, %p137
      %p139 = scmp.ne.s32.totalorder %s127, %s128
      %p140 = scmp.eq.s32.totalorder %s20, 1
      %p141 = por %p139, %p140
      %p143 = scmp.ne.s32.totalorder %s128, %s142
      %p144 = scmp.eq.s32.totalorder %s20, 0
      %p145 = por %p143, %p144
      %s146 = ssub.s32 %s21, %s33
      %p147 = scmp.eq.s32.totalorder %s146, 0
      %s149 = sadd.s32 %s148, 1
      %s150 = scalar_select %p147, %s148, %s149
      %p153 = pneg %p147
      %p154 = scmp.eq.s32.totalorder %s14, 1
      %p155 = por %p153, %p154
      %p156 = scmp.ne.s32.totalorder %s148, %s151
      %p157 = scmp.eq.s32.totalorder %s14, 0
      %p158 = por %p156, %p157
      %p159 = scmp.ne.s32.totalorder %s148, %s151
      %p160 = scmp.eq.s32.totalorder %s19, 1
      %p161 = por %p159, %p160
      %p162 = scmp.ne.s32.totalorder %s151, %s152
      %p163 = scmp.eq.s32.totalorder %s19, 0
      %p164 = por %p162, %p163
      %p165 = scmp.ne.s32.totalorder %s151, %s152
      %p166 = scmp.eq.s32.totalorder %s20, 1
      %p167 = por %p165, %p166
      %p169 = scmp.ne.s32.totalorder %s152, %s168
      %p170 = scmp.eq.s32.totalorder %s20, 0
      %p171 = por %p169, %p170
      %p172 = scmp.le.s32.totalorder 1, %s14
      %p173 = scmp.lt.s32.totalorder %s14, 3
      %p174 = pnand %p172, %p173
      %p175 = pneg %p174
      // Predicated region
      $region9: #{tpu_custom_call.1} parent=5 // pred_check
        _
      $region10: #{tpu_custom_call.1} parent=5 // pred_check_branch
        %177 = sbr.rel (%p174) target = $region12
      $region11: #{tpu_custom_call.1} parent=5 // pred_region
        %s178 = ssub.s32 %s14, 1
        // Predicated region
        $region13: #{tpu_custom_call.1} parent=11 // pred_check
          %p179 = pneg %p75
        $region14: #{tpu_custom_call.1} parent=11 // pred_check_branch
          %181 = sbr.rel (%p179) target = $region16
        $region15: #{tpu_custom_call.1} parent=11 // pred_region
          _
        $region16: #{tpu_custom_call.1} parent=11 // pred_fallthru
          _
        // Predicated region
        $region17: #{tpu_custom_call.1} parent=11 // pred_check
          %p182 = pneg %p96
        $region18: #{tpu_custom_call.1} parent=11 // pred_check_branch
          %184 = sbr.rel (%p182) target = $region20
        $region19: #{tpu_custom_call.1} parent=11 // pred_region
          _
        $region20: #{tpu_custom_call.1} parent=11 // pred_fallthru
          _
        // Predicated region
        $region21: #{tpu_custom_call.1} parent=11 // pred_check
          %p185 = pneg %p117
        $region22: #{tpu_custom_call.1} parent=11 // pred_check_branch
          %187 = sbr.rel (%p185) target = $region24
        $region23: #{tpu_custom_call.1} parent=11 // pred_region
          _
        $region24: #{tpu_custom_call.1} parent=11 // pred_fallthru
          _
        // Predicated region
        $region25: #{tpu_custom_call.1} parent=11 // pred_check
          %p188 = pneg %p138
        $region26: #{tpu_custom_call.1} parent=11 // pred_check_branch
          %190 = sbr.rel (%p188) target = $region28
        $region27: #{tpu_custom_call.1} parent=11 // pred_region
          _
        $region28: #{tpu_custom_call.1} parent=11 // pred_fallthru
          _
      $region12: #{tpu_custom_call.1} parent=5 // pred_fallthru
        _
      %p191 = scmp.lt.s32.totalorder %s14, 2
      // Predicated region
      $region29: #{tpu_custom_call.1} parent=5 // pred_check
        %p192 = pneg %p191
      $region30: #{tpu_custom_call.1} parent=5 // pred_check_branch
        %194 = sbr.rel (%p192) target = $region32
      $region31: #{tpu_custom_call.1} parent=5 // pred_region
        // Predicated region
        $region33: #{tpu_custom_call.1} parent=31 // pred_check
          %p195 = pneg %p48
        $region34: #{tpu_custom_call.1} parent=31 // pred_check_branch
          %197 = sbr.rel (%p195) target = $region36
        $region35: #{tpu_custom_call.1} parent=31 // pred_region
          %s198 = sand.u32 %s38, 1
          %s199 = scalar_lea.sflag [#allocation4], %s198
          %s200 = sand.u32 %s38, 1
          %s201 = smul.addr %s200, 16
          %s202 = scalar_lea.vmem [#allocation3], %s201
          %s204 = ssub.s32 256, 256
          %205 = vsyncadd %s199, %s204
          %s206 = smul.addr %s21, 2
          %s207 = sadd.s32 %s22, %s206
          %s208 = smul.addr %s207, 128
          %s209 = scalar_lea.hbm %s0, %s208
          %s210 = sshll.u32 %s202, 4
          %s211 = int_to_ptr.vmem [resolvable:$true] %s210
          %216 = dma.hbm_to_vmem [thread:$0]  %s209, 256, %s211, %s199, 128, 128, 8
        $region36: #{tpu_custom_call.1} parent=31 // pred_fallthru
          _
      $region32: #{tpu_custom_call.1} parent=5 // pred_fallthru
        _
      %p217 = scmp.le.s32.totalorder 1, %s14
      %p218 = scmp.lt.s32.totalorder %s14, 3
      %p219 = pnand %p217, %p218
      %p220 = pneg %p219
      // Predicated region
      $region37: #{tpu_custom_call.1} parent=5 // pred_check
        _
      $region38: #{tpu_custom_call.1} parent=5 // pred_check_branch
        %222 = sbr.rel (%p219) target = $region40
      $region39: #{tpu_custom_call.1} parent=5 // pred_region
        %s223 = ssub.s32 %s14, 1
        %s224 = sand.u32 %s41, 1
        %s225 = scalar_lea.sflag [#allocation4], %s224
        %s226 = sand.u32 %s41, 1
        %s227 = smul.addr %s226, 16
        %s228 = scalar_lea.vmem [#allocation3], %s227
        // Predicated region
        $region41: #{tpu_custom_call.1} parent=39 // pred_check
          %p229 = pneg %p54
        $region42: #{tpu_custom_call.1} parent=39 // pred_check_branch
          %231 = sbr.rel (%p229) target = $region44
        $region43: #{tpu_custom_call.1} parent=39 // pred_region
          %232 = dma.done %s225, 256
        $region44: #{tpu_custom_call.1} parent=39 // pred_fallthru
          _
        %s233 = sand.u32 %s41, 1
        %s234 = scalar_lea.sflag [#allocation4], %s233
        %s235 = sand.u32 %s41, 1
        %s236 = smul.addr %s235, 16
        %s237 = scalar_lea.vmem [#allocation3], %s236
        %p238 = pneg %p54
        %p239 = pneg %p51
        %p240 = pneg %p75
        %p241 = pneg %p72
        %p242 = pneg %p96
        %p243 = pneg %p93
        %p244 = pneg %p117
        %p245 = pneg %p114
        %p246 = pneg %p138
        %p247 = pneg %p135
        %p248 = pneg %p164
        %p249 = pneg %p161
        %p250 = scmp.lt.s32.totalorder %s23, 1
        %s251 = scalar_select %p250, %s23, 1
        %s252 = smul.addr %s251, 2
        %s253 = smul.addr %s252, 8
        %s254 = scalar_lea.vmem %s5, %s253
        %p255 = scmp.lt.s32.totalorder %s23, 1
        %s256 = scalar_select %p255, %s23, 1
        %s257 = smul.addr %s256, 2
        %s258 = smul.addr %s257, 8
        %s259 = scalar_lea.vmem %s5, %s258
        %p260 = scmp.eq.s32.totalorder %s24, 0
        // Predicated region
        $region45: #{tpu_custom_call.1} parent=39 // pred_check
          %p261 = pneg %p260
        $region46: #{tpu_custom_call.1} parent=39 // pred_check_branch
          %263 = sbr.rel (%p261) target = $region48
        $region47: #{tpu_custom_call.1} parent=39 // pred_region
          %vm264 = vcmask 122880
          %265 = vst.msk [vmem:[#allocation2] sm:$0x1] %vm264, 0.0
        $region48: #{tpu_custom_call.1} parent=39 // pred_fallthru
          _
        %v266 = vld [vmem:[#allocation2] sm:$0x1]
        %v267 = vld [vmem:[%s228] sm:$0xff]
        %v268 = vld [vmem:[%s228 + $0x8] sm:$0xff]
        %vm269 = vcmask 130048
        %v270 = vsel %vm269, %v267, 0.0
        %271 = vadd.xlane.f32.xlu0 %v270
        %v272 = vpop.xlane.xlu0 %271
        %v273 = vsel %vm269, %v268, 0.0
        %274 = vadd.xlane.f32.xlu0 %v273
        %v275 = vpop.xlane.xlu0 %274
        %v278 = vlaneseq
        %v279 = vshrl.u32 %v278, 7
        %v280 = vsub.s32 0, %v279
        %v281 = vrot.slane %v272, %v280
        %v282 = vlaneseq
        %v283 = vshrl.u32 %v282, 7
        %v284 = vsub.s32 1, %v283
        %v285 = vrot.slane %v272, %v284
        %v286 = vlaneseq
        %v287 = vshrl.u32 %v286, 7
        %v288 = vsub.s32 2, %v287
        %v289 = vrot.slane %v272, %v288
        %v290 = vlaneseq
        %v291 = vshrl.u32 %v290, 7
        %v292 = vsub.s32 3, %v291
        %v293 = vrot.slane %v272, %v292
        %v294 = vlaneseq
        %v295 = vshrl.u32 %v294, 7
        %v296 = vsub.s32 4, %v295
        %v297 = vrot.slane %v272, %v296
        %v298 = vlaneseq
        %v299 = vshrl.u32 %v298, 7
        %v300 = vsub.s32 5, %v299
        %v301 = vrot.slane %v272, %v300
        %v302 = vlaneseq
        %v303 = vshrl.u32 %v302, 7
        %v304 = vsub.s32 6, %v303
        %v305 = vrot.slane %v272, %v304
        %v306 = vlaneseq
        %v307 = vshrl.u32 %v306, 7
        %v308 = vsub.s32 7, %v307
        %v309 = vrot.slane %v272, %v308
        %v310 = vlaneseq
        %v311 = vshrl.u32 %v310, 7
        %v312 = vsub.s32 0, %v311
        %v313 = vrot.slane %v275, %v312
        %v314 = vlaneseq
        %v315 = vshrl.u32 %v314, 7
        %v316 = vsub.s32 1, %v315
        %v317 = vrot.slane %v275, %v316
        %v318 = vlaneseq
        %v319 = vshrl.u32 %v318, 7
        %v320 = vsub.s32 2, %v319
        %v321 = vrot.slane %v275, %v320
        %v322 = vlaneseq
        %v323 = vshrl.u32 %v322, 7
        %v324 = vsub.s32 3, %v323
        %v325 = vrot.slane %v275, %v324
        %v326 = vlaneseq
        %v327 = vshrl.u32 %v326, 7
        %v328 = vsub.s32 4, %v327
        %v329 = vrot.slane %v275, %v328
        %v330 = vlaneseq
        %v331 = vshrl.u32 %v330, 7
        %v332 = vsub.s32 5, %v331
        %v333 = vrot.slane %v275, %v332
        %v334 = vlaneseq
        %v335 = vshrl.u32 %v334, 7
        %v336 = vsub.s32 6, %v335
        %v337 = vrot.slane %v275, %v336
        %v338 = vlaneseq
        %v339 = vshrl.u32 %v338, 7
        %v340 = vsub.s32 7, %v339
        %v341 = vrot.slane %v275, %v340
        %v342 = vcombine.low %v281, %v285
        %v343 = vcombine.low %v289, %v293
        %v344 = vcombine.low %v297, %v301
        %v345 = vcombine.low %v305, %v309
        %v347 = vunpack.c.l.s4 1966171168
        %v348 = vunpack.c.0.s8 %v347
        %v349 = vlaneseq
        %v350 = vshrl.u32 %v349, 7
        %v351 = vsub.s32 %v348, %v350
        %v352 = vrot.slane %v342, %v351
        %v354 = vunpack.c.l.s4 1966171168
        %v355 = vunpack.c.0.s8 %v354
        %v356 = vlaneseq
        %v357 = vshrl.u32 %v356, 7
        %v358 = vsub.s32 %v355, %v357
        %v359 = vrot.slane %v343, %v358
        %v361 = vunpack.c.l.s4 1966171168
        %v362 = vunpack.c.0.s8 %v361
        %v363 = vlaneseq
        %v364 = vshrl.u32 %v363, 7
        %v365 = vsub.s32 %v362, %v364
        %v366 = vrot.slane %v344, %v365
        %v368 = vunpack.c.l.s4 1966171168
        %v369 = vunpack.c.0.s8 %v368
        %v370 = vlaneseq
        %v371 = vshrl.u32 %v370, 7
        %v372 = vsub.s32 %v369, %v371
        %v373 = vrot.slane %v345, %v372
        %v374 = vcombine.low %v352, %v359
        %v375 = vcombine.low %v366, %v373
        %v377 = vunpack.c.l.s4 1966171168
        %v378 = vunpack.c.0.s8 %v377
        %v379 = vlaneseq
        %v380 = vshrl.u32 %v379, 7
        %v381 = vsub.s32 %v378, %v380
        %v382 = vrot.slane %v374, %v381
        %v384 = vunpack.c.l.s4 1966171168
        %v385 = vunpack.c.0.s8 %v384
        %v386 = vlaneseq
        %v387 = vshrl.u32 %v386, 7
        %v388 = vsub.s32 %v385, %v387
        %v389 = vrot.slane %v375, %v388
        %v390 = vcombine.low %v382, %v389
        %v391 = vcombine.low %v313, %v317
        %v392 = vcombine.low %v321, %v325
        %v393 = vcombine.low %v329, %v333
        %v394 = vcombine.low %v337, %v341
        %v396 = vunpack.c.l.s4 1966171168
        %v397 = vunpack.c.0.s8 %v396
        %v398 = vlaneseq
        %v399 = vshrl.u32 %v398, 7
        %v400 = vsub.s32 %v397, %v399
        %v401 = vrot.slane %v391, %v400
        %v403 = vunpack.c.l.s4 1966171168
        %v404 = vunpack.c.0.s8 %v403
        %v405 = vlaneseq
        %v406 = vshrl.u32 %v405, 7
        %v407 = vsub.s32 %v404, %v406
        %v408 = vrot.slane %v392, %v407
        %v410 = vunpack.c.l.s4 1966171168
        %v411 = vunpack.c.0.s8 %v410
        %v412 = vlaneseq
        %v413 = vshrl.u32 %v412, 7
        %v414 = vsub.s32 %v411, %v413
        %v415 = vrot.slane %v393, %v414
        %v417 = vunpack.c.l.s4 1966171168
        %v418 = vunpack.c.0.s8 %v417
        %v419 = vlaneseq
        %v420 = vshrl.u32 %v419, 7
        %v421 = vsub.s32 %v418, %v420
        %v422 = vrot.slane %v394, %v421
        %v423 = vcombine.low %v401, %v408
        %v424 = vcombine.low %v415, %v422
        %v426 = vunpack.c.l.s4 1966171168
        %v427 = vunpack.c.0.s8 %v426
        %v428 = vlaneseq
        %v429 = vshrl.u32 %v428, 7
        %v430 = vsub.s32 %v427, %v429
        %v431 = vrot.slane %v423, %v430
        %v433 = vunpack.c.l.s4 1966171168
        %v434 = vunpack.c.0.s8 %v433
        %v435 = vlaneseq
        %v436 = vshrl.u32 %v435, 7
        %v437 = vsub.s32 %v434, %v436
        %v438 = vrot.slane %v424, %v437
        %v439 = vcombine.low %v431, %v438
        %440 = vset.pattern.permute.xlu0 0
        %441 = vperm.xlu0 %440, %v390
        %v442 = vpop.permute.xlu0 %441
        %443 = vset.pattern.permute.xlu0 0
        %444 = vperm.xlu0 %443, %v439
        %v445 = vpop.permute.xlu0 %444
        %v446 = vlaneseq
        %v447 = vand.u32 %v446, 127
        %v448 = vlaneseq
        %v449 = vshrl.u32 %v448, 7
        %v450 = vsub.s32 %v447, %v449
        %v451 = vrot.slane %v442, %v450
        %v452 = vadd.s32 %v447, 4294967288
        %v453 = vlaneseq
        %v454 = vshrl.u32 %v453, 7
        %v455 = vsub.s32 %v452, %v454
        %v456 = vrot.slane %v445, %v455
        %vm457 = vcmask 130112
        %v458 = vsel %vm457, %v456, %v451
        %v460 = vunpack.c.l.s4 1966171168
        %v461 = vunpack.c.0.s8 %v460
        %v462 = vlaneseq
        %v463 = vshrl.u32 %v462, 7
        %v464 = vsub.s32 %v461, %v463
        %v465 = vrot.slane %v458, %v464
        %v467 = vunpack.c.l.s4 1966171168
        %v468 = vunpack.c.0.s8 %v467
        %v469 = vlaneseq
        %v470 = vshrl.u32 %v469, 7
        %v471 = vsub.s32 %v468, %v470
        %v472 = vrot.slane %v465, %v471
        %v474 = vadd.f32 %v266, %v472
        %vm475 = vcmask 122880
        %476 = vst.msk [vmem:[#allocation2] sm:$0x1] %vm475, %v474
        // Predicated region
        $region49: #{tpu_custom_call.1} parent=39 // pred_check
          %p477 = pneg %p260
        $region50: #{tpu_custom_call.1} parent=39 // pred_check_branch
          %479 = sbr.rel (%p477) target = $region52
        $region51: #{tpu_custom_call.1} parent=39 // pred_region
          %v480 = vld [vmem:[#allocation2] sm:$0x1]
          %v481 = vmul.f32 %v480, 0.0625
          %v482 = vld [vmem:[%s1] sm:$0xff]
          %v483 = vld [vmem:[%s1 + $0x8] sm:$0xff]
          %v484 = vld [vmem:[%s2] sm:$0x1]
          %v486 = vsel %vm269, %v481, 0
          %488 = vmatprep.subr.mxu0 0.0
          %489 = vmatpush1.msra.mxu0 0.0
          %490 = vmatprep.subr.mxu0 0.0
          %491 = vmatpush1.msra.mxu0 0.0
          %492 = vmatprep.subr.mxu0 0.0
          %493 = vmatpush1.msra.mxu0 0.0
          %494 = vmatprep.subr.mxu0 0.0
          %495 = vmatpush1.msra.mxu0 0.0
          %496 = vmatprep.subr.mxu0 0.0
          %497 = vmatpush1.msra.mxu0 0.0
          %498 = vmatprep.subr.mxu0 0.0
          %499 = vmatpush1.msra.mxu0 0.0
          %500 = vmatprep.subr.mxu0 0.0
          %501 = vmatpush1.msra.mxu0 0.0
          %502 = vmatprep.subr.mxu0 0.0
          %503 = vmatpush1.msra.mxu0 0.0
          %504 = vmatprep.subr.mxu0 0.0
          %505 = vmatpush1.msra.mxu0 0.0
          %506 = vmatprep.subr.mxu0 0.0
          %507 = vmatpush1.msra.mxu0 0.0
          %508 = vmatprep.subr.mxu0 0.0
          %509 = vmatpush1.msra.mxu0 0.0
          %510 = vmatprep.subr.mxu0 0.0
          %511 = vmatpush1.msra.mxu0 0.0
          %512 = vmatprep.subr.mxu0 0.0
          %513 = vmatpush1.msra.mxu0 0.0
          %514 = vmatprep.subr.mxu0 0.0
          %515 = vmatpush1.msra.mxu0 0.0
          %516 = vmatprep.subr.mxu0 0.0
          %517 = vmatpush1.msra.mxu0 %v483
          %518 = vmatprep.subr.mxu0 0.0
          %519 = vmatpush1.msra.mxu0 %v482
          %520 = vmatprep.subr.mxu0 0.0
          %521 = vmatpush2.msra.mxu0 0.0
          %522 = vmatprep.subr.mxu0 0.0
          %523 = vmatpush2.msra.mxu0 0.0
          %524 = vmatprep.subr.mxu0 0.0
          %525 = vmatpush2.msra.mxu0 0.0
          %526 = vmatprep.subr.mxu0 0.0
          %527 = vmatpush2.msra.mxu0 0.0
          %528 = vmatprep.subr.mxu0 0.0
          %529 = vmatpush2.msra.mxu0 0.0
          %530 = vmatprep.subr.mxu0 0.0
          %531 = vmatpush2.msra.mxu0 0.0
          %532 = vmatprep.subr.mxu0 0.0
          %533 = vmatpush2.msra.mxu0 0.0
          %534 = vmatprep.subr.mxu0 0.0
          %535 = vmatpush2.msra.mxu0 0.0
          %536 = vmatprep.subr.mxu0 0.0
          %537 = vmatpush2.msra.mxu0 0.0
          %538 = vmatprep.subr.mxu0 0.0
          %539 = vmatpush2.msra.mxu0 0.0
          %540 = vmatprep.subr.mxu0 0.0
          %541 = vmatpush2.msra.mxu0 0.0
          %542 = vmatprep.subr.mxu0 0.0
          %543 = vmatpush2.msra.mxu0 0.0
          %544 = vmatprep.subr.mxu0 0.0
          %545 = vmatpush2.msra.mxu0 0.0
          %546 = vmatprep.subr.mxu0 0.0
          %547 = vmatpush2.msra.mxu0 0.0
          %548 = vmatprep.subr.mxu0 0.0
          %549 = vmatpush2.msra.mxu0 0.0
          %550 = vmatprep.subr.mxu0 0.0
          %551 = vmatpush2.msra.mxu0 0.0
          %552 = vmatprep.mubr.f32.mxu0 0.0
          %553 = vmatmul.mubr.f32.gmra.mxu0 %v486
          %v554 = vpop.f32.mrf.mxu0
          %v555 = vadd.f32 %v484, %v554
          %v556 = vpop.f32.mrf.mxu0
          %557 = vdwg.mxu0
          %v558 = vmax.f32 %v555, 0.0
          %v559 = vld [vmem:[%s3] sm:$0xf]
          %v560 = vld [vmem:[%s4] sm:$0x1]
          %vm561 = vcmask 31744
          %v563 = vsel %vm561, %v558, 0
          %vm565 = vcmask 1043456
          %v567 = vsel %vm565, %v559, 0
          %569 = vmatprep.subr.mxu0 0.0
          %570 = vmatpush1.msra.mxu0 0.0
          %571 = vmatprep.subr.mxu0 0.0
          %572 = vmatpush1.msra.mxu0 0.0
          %573 = vmatprep.subr.mxu0 0.0
          %574 = vmatpush1.msra.mxu0 0.0
          %575 = vmatprep.subr.mxu0 0.0
          %576 = vmatpush1.msra.mxu0 0.0
          %577 = vmatprep.subr.mxu0 0.0
          %578 = vmatpush1.msra.mxu0 0.0
          %579 = vmatprep.subr.mxu0 0.0
          %580 = vmatpush1.msra.mxu0 0.0
          %581 = vmatprep.subr.mxu0 0.0
          %582 = vmatpush1.msra.mxu0 0.0
          %583 = vmatprep.subr.mxu0 0.0
          %584 = vmatpush1.msra.mxu0 0.0
          %585 = vmatprep.subr.mxu0 0.0
          %586 = vmatpush1.msra.mxu0 0.0
          %587 = vmatprep.subr.mxu0 0.0
          %588 = vmatpush1.msra.mxu0 0.0
          %589 = vmatprep.subr.mxu0 0.0
          %590 = vmatpush1.msra.mxu0 0.0
          %591 = vmatprep.subr.mxu0 0.0
          %592 = vmatpush1.msra.mxu0 0.0
          %593 = vmatprep.subr.mxu0 0.0
          %594 = vmatpush1.msra.mxu0 0.0
          %595 = vmatprep.subr.mxu0 0.0
          %596 = vmatpush1.msra.mxu0 0.0
          %597 = vmatprep.subr.mxu0 0.0
          %598 = vmatpush1.msra.mxu0 0.0
          %599 = vmatprep.subr.mxu0 0.0
          %600 = vmatpush1.msra.mxu0 %v567
          %601 = vmatprep.subr.mxu0 0.0
          %602 = vmatpush2.msra.mxu0 0.0
          %603 = vmatprep.subr.mxu0 0.0
          %604 = vmatpush2.msra.mxu0 0.0
          %605 = vmatprep.subr.mxu0 0.0
          %606 = vmatpush2.msra.mxu0 0.0
          %607 = vmatprep.subr.mxu0 0.0
          %608 = vmatpush2.msra.mxu0 0.0
          %609 = vmatprep.subr.mxu0 0.0
          %610 = vmatpush2.msra.mxu0 0.0
          %611 = vmatprep.subr.mxu0 0.0
          %612 = vmatpush2.msra.mxu0 0.0
          %613 = vmatprep.subr.mxu0 0.0
          %614 = vmatpush2.msra.mxu0 0.0
          %615 = vmatprep.subr.mxu0 0.0
          %616 = vmatpush2.msra.mxu0 0.0
          %617 = vmatprep.subr.mxu0 0.0
          %618 = vmatpush2.msra.mxu0 0.0
          %619 = vmatprep.subr.mxu0 0.0
          %620 = vmatpush2.msra.mxu0 0.0
          %621 = vmatprep.subr.mxu0 0.0
          %622 = vmatpush2.msra.mxu0 0.0
          %623 = vmatprep.subr.mxu0 0.0
          %624 = vmatpush2.msra.mxu0 0.0
          %625 = vmatprep.subr.mxu0 0.0
          %626 = vmatpush2.msra.mxu0 0.0
          %627 = vmatprep.subr.mxu0 0.0
          %628 = vmatpush2.msra.mxu0 0.0
          %629 = vmatprep.subr.mxu0 0.0
          %630 = vmatpush2.msra.mxu0 0.0
          %631 = vmatprep.subr.mxu0 0.0
          %632 = vmatpush2.msra.mxu0 0.0
          %633 = vmatprep.mubr.f32.mxu0 0.0
          %634 = vmatmul.mubr.f32.gmra.mxu0 %v563
          %v635 = vpop.f32.mrf.mxu0
          %v636 = vadd.f32 %v560, %v635
          %v637 = vpop.f32.mrf.mxu0
          %638 = vdwg.mxu0
          %v639 = vxor.u32 %v636, 2147483648
          %v640 = vmul.f32 %v639, 1.442695
          %v641 = vpow.pop %v640
          %v642 = vadd.f32 %v641, 1.0
          %v643 = vrcp.pop %v642
          %v644 = vmul.f32 1.0, %v643
          %v645 = vlaneseq
          %v646 = vshrl.u32 %v645, 7
          %v647 = vsub.s32 0, %v646
          %v648 = vrot.slane %v644, %v647
          %650 = vbcast.lane.b32.xlu0 %v648, 256
          %v651 = vpop.permute.xlu0 %650
          %s653 = sor.u32 256, 8
          %654 = vbcast.lane.b32.xlu0 %v648, %s653
          %v655 = vpop.permute.xlu0 %654
          %vm656 = vcmask 7168
          %657 = vst.msk [vmem:[%s259] sm:$0xff] %vm656, %v651
          %658 = vst.msk [vmem:[%s259 + $0x8] sm:$0xff] %vm656, %v655
        $region52: #{tpu_custom_call.1} parent=39 // pred_fallthru
          _
        %p659 = scmp.lt.s32.totalorder %s23, 1
        %s660 = scalar_select %p659, %s23, 1
        %s661 = smul.addr %s660, 2
        %s662 = smul.addr %s661, 8
        %s663 = scalar_lea.vmem %s5, %s662
        // Predicated region
        $region53: #{tpu_custom_call.1} parent=39 // pred_check
          %p664 = pneg %p161
        $region54: #{tpu_custom_call.1} parent=39 // pred_check_branch
          %666 = sbr.rel (%p664) target = $region56
        $region55: #{tpu_custom_call.1} parent=39 // pred_region
          _
        $region56: #{tpu_custom_call.1} parent=39 // pred_fallthru
          _
      $region40: #{tpu_custom_call.1} parent=5 // pred_fallthru
        _
      %p667 = scmp.le.s32.totalorder 2, %s14
      // Predicated region
      $region57: #{tpu_custom_call.1} parent=5 // pred_check
        %p668 = pneg %p667
      $region58: #{tpu_custom_call.1} parent=5 // pred_check_branch
        %670 = sbr.rel (%p668) target = $region60
      $region59: #{tpu_custom_call.1} parent=5 // pred_region
        %s671 = ssub.s32 %s14, 2
        // Predicated region
        $region61: #{tpu_custom_call.1} parent=59 // pred_check
          %p672 = pneg %p167
        $region62: #{tpu_custom_call.1} parent=59 // pred_check_branch
          %674 = sbr.rel (%p672) target = $region64
        $region63: #{tpu_custom_call.1} parent=59 // pred_region
          %p675 = scmp.lt.s32.totalorder %s25, 1
          %s676 = scalar_select %p675, %s25, 1
          %s677 = smul.addr %s676, 2
          %s678 = smul.addr %s677, 8
          %s679 = scalar_lea.vmem %s5, %s678
        $region64: #{tpu_custom_call.1} parent=59 // pred_fallthru
          _
      $region60: #{tpu_custom_call.1} parent=5 // pred_fallthru
        _
    $region6: #{tpu_custom_call.1} parent=1 // loop_footer
      %s18 = sadd.s32 1, %s14
    $region7: #{tpu_custom_call.1} parent=1 // loop_footer_branch
      %13 = sbr.rel target = $region3
    $region8: #{tpu_custom_call.1} parent=1 // loop_exit
      _
    %680 = vsyncpa [#allocation4], 1
    %s681 = scalar_lea.sflag [#allocation4], 1
    %682 = vsyncpa %s681, 1

</llo_original>
